<compile_context>
chip_gen: v6e
topology: v6e:2x2x1
jax: 0.10.0
libtpu: 0.0.40
codegen_flags: <defaults>
</compile_context>

<pallas_src>
import functools

import jax
import jax.numpy as jnp
from jax.experimental import pallas as pl
from jax.experimental.pallas import tpu as pltpu  # noqa: F401  (TPU backend assumed)


def _mixdist_kernel(x_ref, slab_ref, means_ref, *, D, H):
    """x_ref: (B, D) f32; slab_ref: (rows_p, 128) packed params; means_ref: (B, 2)."""
    H2 = 2 * H
    x = x_ref[...]                                                    # (B, D)

    # Static slices of the parameter slab (free: no runtime cost).
    w1 = slab_ref[0:D, 0:H2]                                          # (D, 2H)
    b1 = slab_ref[D:D + 1, 0:H2]                                      # (1, 2H)
    w2 = slab_ref[D + 1:D + 1 + H2, 0:2]                              # (2H, 2)
    b2 = slab_ref[D + 1 + H2:D + 2 + H2, 0:2]                         # (1, 2)

    # Fused layer 1: Linear + ReLU over both heads at once.
    h = jnp.dot(x, w1, preferred_element_type=jnp.float32) + b1
    h = jnp.maximum(h, 0.0)                                           # (B, 2H)

    # Fused layer 2: block-diagonal W2 keeps the heads independent.
    z = jnp.dot(h, w2, preferred_element_type=jnp.float32) + b2       # (B, 2)

    # Column 0 -> tanh (steer head), column 1 -> sigmoid (speed head).
    # sigmoid(z) = 0.5*(tanh(z/2)+1): one EUP tanh pass covers both columns.
    col = jax.lax.broadcasted_iota(jnp.int32, z.shape, 1)
    is_steer = col == 0
    t = jnp.tanh(z * jnp.where(is_steer, 1.0, 0.5))
    means_ref[...] = jnp.where(is_steer, t, 0.5 * t + 0.5)


def fuse_params(params):
    """One-time parameter fusion: build the packed slab + precompute stds."""
    D, H = params["steer_w1"].shape
    assert params["speed_w1"].shape == (D, H), "heads must share hidden size"
    H2 = 2 * H
    assert H2 <= 128, "slab width assumes 2H <= one lane tile"

    w1 = jnp.concatenate([params["steer_w1"], params["speed_w1"]], axis=1)   # (D, 2H)
    b1 = jnp.concatenate([params["steer_b1"], params["speed_b1"]], axis=1)   # (1, 2H)
    zcol = jnp.zeros((H, 1), jnp.float32)
    w2 = jnp.concatenate(
        [jnp.concatenate([params["steer_w2"], zcol], axis=1),                # rows 0..H-1
         jnp.concatenate([zcol, params["speed_w2"]], axis=1)],               # rows H..2H-1
        axis=0)                                                              # (2H, 2)
    b2 = jnp.concatenate([params["steer_b2"], params["speed_b2"]], axis=1)   # (1, 2)

    rows = D + 1 + H2 + 1
    rows_p = ((rows + 7) // 8) * 8            # sublane-align
    slab = jnp.zeros((rows_p, 128), jnp.float32)
    slab = slab.at[0:D, 0:H2].set(w1)
    slab = slab.at[D:D + 1, 0:H2].set(b1)
    slab = slab.at[D + 1:D + 1 + H2, 0:2].set(w2)
    slab = slab.at[D + 1 + H2:D + 2 + H2, 0:2].set(b2)

    return {
        "slab": slab,
        "D": int(D),
        "H": int(H),
        # Parameter-only stds: compute once at fuse time, not per step.
        "steer_std": jnp.exp(jnp.tanh(params["steer_logstd"])),   # (1, 1)
        "speed_std": jnp.exp(jnp.tanh(params["speed_logstd"])),   # (1, 1)
    }


def mixdist_forward(x, fused):
    """Returns means of shape (B, 2): col 0 = steer_mean, col 1 = speed_mean."""
    B = x.shape[0]
    slab = fused["slab"]

    def full_spec(shape):
        return pl.BlockSpec(shape, lambda: (0,) * len(shape))

    kernel = functools.partial(_mixdist_kernel, D=fused["D"], H=fused["H"])

    # Tiny problem: one invocation, all operands resident in VMEM. For large B,
    # switch to grid=(pl.cdiv(B, TB),) with the slab mapped by a constant
    # index_map and dimension_semantics=("parallel",) to use both v7x cores.
    return pl.pallas_call(
        kernel,
        out_shape=jax.ShapeDtypeStruct((B, 2), jnp.float32),
        grid=(),
        in_specs=[full_spec(x.shape), full_spec(slab.shape)],
        out_specs=full_spec((B, 2)),
    )(x, slab)


def _normc_init(key, in_features, out_features):
    """PyTorch init_normc_: normal(0,1), normalize each output unit; stored as
    (in, out) so each column has unit norm."""
    w = jax.random.normal(key, (in_features, out_features), dtype=jnp.float32)
    w = w / jnp.sqrt(jnp.sum(w * w, axis=0, keepdims=True))
    return w


def make_params(key, num_inputs, hidsize=32):
    ks = jax.random.split(key, 4)
    return {
        "steer_w1": _normc_init(ks[0], num_inputs, hidsize),
        "steer_b1": jnp.zeros((1, hidsize), jnp.float32),
        "steer_w2": _normc_init(ks[1], hidsize, 1),
        "steer_b2": jnp.zeros((1, 1), jnp.float32),
        "speed_w1": _normc_init(ks[2], num_inputs, hidsize),
        "speed_b1": jnp.zeros((1, hidsize), jnp.float32),
        "speed_w2": _normc_init(ks[3], hidsize, 1),
        "speed_b2": jnp.zeros((1, 1), jnp.float32),
        # AddBias params (zeros in the PyTorch module)
        "steer_logstd": jnp.zeros((1, 1), jnp.float32),
        "speed_logstd": jnp.zeros((1, 1), jnp.float32),
    }


def _reference(x, p):
    h_s = jnp.maximum(x @ p["steer_w1"] + p["steer_b1"], 0.0)
    steer_mean = jnp.tanh(h_s @ p["steer_w2"] + p["steer_b2"])
    h_p = jnp.maximum(x @ p["speed_w1"] + p["speed_b1"], 0.0)
    speed_mean = jax.nn.sigmoid(h_p @ p["speed_w2"] + p["speed_b2"])
    steer_std = jnp.broadcast_to(jnp.exp(jnp.tanh(p["steer_logstd"])), steer_mean.shape)
    speed_std = jnp.broadcast_to(jnp.exp(jnp.tanh(p["speed_logstd"])), speed_mean.shape)
    return steer_mean, speed_mean, steer_std, speed_std


if __name__ == "__main__":
    key = jax.random.PRNGKey(0)
    k_x, k_p = jax.random.split(key)

    B, num_inputs = 8, 32
    x = jax.random.normal(k_x, (B, num_inputs), dtype=jnp.float32)
    params = make_params(k_p, num_inputs, hidsize=32)

    fused = fuse_params(params)                       # one-time parameter fusion
    fwd = jax.jit(lambda xx: mixdist_forward(xx, fused))
    means = jax.block_until_ready(fwd(x))             # (B, 2)

    steer_mean = means[:, 0:1]
    speed_mean = means[:, 1:2]
    steer_std = jnp.broadcast_to(fused["steer_std"], (B, 1))
    speed_std = jnp.broadcast_to(fused["speed_std"], (B, 1))

    refs = _reference(x, params)
    outs = (steer_mean, speed_mean, steer_std, speed_std)
    for o, r in zip(outs, refs):
        assert o.shape == (B, 1)
        assert jnp.allclose(o, r, atol=1e-5, rtol=1e-5)

    print("KERNEL_OK")
</pallas_src>

<mosaic_0001>
module attributes {stable_mosaic.version = 11 : i64} {
  func.func @_mixdist_kernel(%arg0: memref<8x32xf32, #tpu.memory_space<vmem>>, %arg1: memref<104x128xf32, #tpu.memory_space<vmem>>, %arg2: memref<8x2xf32, #tpu.memory_space<vmem>>) attributes {dimension_semantics = [], scalar_prefetch = 0 : i64, scratch_operands = 0 : i64, tpu.core_type = #tpu.core_type<tc>} {
    %c0 = arith.constant 0 : index
    %c0_0 = arith.constant 0 : index
    %0 = vector.load %arg0[%c0, %c0_0] : memref<8x32xf32, #tpu.memory_space<vmem>>, vector<8x32xf32>
    %c0_1 = arith.constant 0 : index
    %c0_2 = arith.constant 0 : index
    %1 = vector.load %arg1[%c0_1, %c0_2] : memref<104x128xf32, #tpu.memory_space<vmem>>, vector<32x64xf32>
    %c32 = arith.constant 32 : index
    %c0_3 = arith.constant 0 : index
    %2 = vector.load %arg1[%c32, %c0_3] : memref<104x128xf32, #tpu.memory_space<vmem>>, vector<1x64xf32>
    %c33 = arith.constant 33 : index
    %c0_4 = arith.constant 0 : index
    %3 = vector.load %arg1[%c33, %c0_4] : memref<104x128xf32, #tpu.memory_space<vmem>>, vector<64x2xf32>
    %c97 = arith.constant 97 : index
    %c0_5 = arith.constant 0 : index
    %4 = vector.load %arg1[%c97, %c0_5] : memref<104x128xf32, #tpu.memory_space<vmem>>, vector<1x2xf32>
    %cst = arith.constant dense<0.000000e+00> : vector<8x64xf32>
    %5 = tpu.matmul %0, %1, %cst {dimension_numbers = #tpu.dot_dimension_numbers<[1], [0], [0], [1], [0, 0, 1, 1], [], []>} : vector<8x32xf32>, vector<32x64xf32>, vector<8x64xf32> -> vector<8x64xf32>
    %6 = vector.broadcast %2 : vector<1x64xf32> to vector<8x64xf32>
    %7 = arith.addf %5, %6 : vector<8x64xf32>
    %cst_6 = arith.constant 0.000000e+00 : f32
    %8 = vector.broadcast %cst_6 : f32 to vector<8x64xf32>
    %9 = arith.maximumf %7, %8 : vector<8x64xf32>
    %cst_7 = arith.constant dense<0.000000e+00> : vector<8x2xf32>
    %10 = tpu.matmul %9, %3, %cst_7 {dimension_numbers = #tpu.dot_dimension_numbers<[1], [0], [0], [1], [0, 0, 1, 1], [], []>} : vector<8x64xf32>, vector<64x2xf32>, vector<8x2xf32> -> vector<8x2xf32>
    %11 = vector.broadcast %4 : vector<1x2xf32> to vector<8x2xf32>
    %12 = arith.addf %10, %11 : vector<8x2xf32>
    %13 = tpu.iota {dimensions = array<i32: 1>} : vector<8x2xi32>
    %c0_i32 = arith.constant 0 : i32
    %14 = vector.broadcast %c0_i32 : i32 to vector<8x2xi32>
    %15 = arith.cmpi eq, %13, %14 : vector<8x2xi32>
    %cst_8 = arith.constant 1.000000e+00 : f32
    %cst_9 = arith.constant 5.000000e-01 : f32
    %16 = vector.broadcast %cst_8 : f32 to vector<8x2xf32>
    %17 = vector.broadcast %cst_9 : f32 to vector<8x2xf32>
    %18 = arith.select %15, %16, %17 : vector<8x2xi1>, vector<8x2xf32>
    %19 = arith.mulf %12, %18 : vector<8x2xf32>
    %20 = math.tanh %19 : vector<8x2xf32>
    %cst_10 = arith.constant 5.000000e-01 : f32
    %21 = vector.broadcast %cst_10 : f32 to vector<8x2xf32>
    %22 = arith.mulf %21, %20 : vector<8x2xf32>
    %cst_11 = arith.constant 5.000000e-01 : f32
    %23 = vector.broadcast %cst_11 : f32 to vector<8x2xf32>
    %24 = arith.addf %22, %23 : vector<8x2xf32>
    %25 = arith.select %15, %20, %24 : vector<8x2xi1>, vector<8x2xf32>
    %c0_12 = arith.constant 0 : index
    %c0_13 = arith.constant 0 : index
    %26 = vector.load %arg2[%c0_12, %c0_13] : memref<8x2xf32, #tpu.memory_space<vmem>>, vector<8x2xf32>
    tpu.vector_store %arg2[%c0_12, %c0_13], %25 {strides = array<i32>} : memref<8x2xf32, #tpu.memory_space<vmem>>, vector<8x2xf32>,
    return
  }
}

</mosaic_0001>

<llo_original>
// kernel: _lambda_.1
$region0: #{_lambda_.1}
  #allocation0 [shape = 'u32[]', space=smem, size = 0x4, offset = 0x4, fixed_abs, tag = 'smem constant byte address 0x4 - core index']
  #allocation1 [shape = 'u32[144,128]{1,0:T(1,128)}', space=vmem, size = 0x12000, scoped, tag = 'internal scratch']
  %s0 = inlined_call_operand.hbm [shape: f32[8,32], index: 0, kind: input, shape index: {}]
  %s1 = inlined_call_operand.hbm [shape: f32[104,128], index: 1, kind: input, shape index: {}]
  %s2 = inlined_call_operand.vmem [shape: f32[8,2], index: 2, kind: output, shape index: {}]
  %s3 = sld [smem:[#allocation0]]
  $region26: #{_lambda_.1} parent=0
    _
  %s5 = ssub.s32 1, %s3
  %s6 = scalar_select 0, %s5, %s3
  $region1: #{_lambda_.1} parent=0
    #allocation2 [shape = 'u8[4096]{0}', space=vmem, size = 0x1000, scoped, tag = 'input window, operand 0, single buffered']
    #allocation3 [shape = 's32[1]{0}', space=sflag, size = 0x4, scoped, tag = 'scoped memory for _lambda_.1']
    #allocation4 [shape = 'u8[53248]{0}', space=vmem, size = 0xd000, scoped, tag = 'input window, operand 1, single buffered']
    #allocation5 [shape = 's32[1]{0}', space=sflag, size = 0x4, scoped, tag = 'scoped memory for _lambda_.1']
    %7 = vsyncpa [#allocation3], 0
    %8 = vsyncpa [#allocation5], 0
    // Predicated region
    $region2: #{_lambda_.1} parent=1 // pred_check
      _
    $region3: #{_lambda_.1} parent=1 // pred_check_branch
      %10 = sbr.rel (0) target = $region5
    $region4: #{_lambda_.1} parent=1 // pred_region
      %s12 = ssub.s32 128, 128
      %13 = vsyncadd [#allocation3], %s12
      %s15 = sshll.u32 [#allocation2], 4
      %s16 = int_to_ptr.vmem [resolvable:$true] %s15
      %18 = dma.hbm_to_vmem [thread:$0]  %s0, 128, %s16, [#allocation3]
    $region5: #{_lambda_.1} parent=1 // pred_fallthru
      _
    // Predicated region
    $region6: #{_lambda_.1} parent=1 // pred_check
      _
    $region7: #{_lambda_.1} parent=1 // pred_check_branch
      %20 = sbr.rel (0) target = $region9
    $region8: #{_lambda_.1} parent=1 // pred_region
      %s22 = ssub.s32 1664, 1664
      %23 = vsyncadd [#allocation5], %s22
      %s24 = sshll.u32 [#allocation4], 4
      %s25 = int_to_ptr.vmem [resolvable:$true] %s24
      %30 = dma.hbm_to_vmem [thread:$0]  %s1, 1664, %s25, [#allocation5], 128, 128, 8
    $region9: #{_lambda_.1} parent=1 // pred_fallthru
      _
    // Predicated region
    $region10: #{_lambda_.1} parent=1 // pred_check
      _
    $region11: #{_lambda_.1} parent=1 // pred_check_branch
      %32 = sbr.rel (0) target = $region13
    $region12: #{_lambda_.1} parent=1 // pred_region
      %33 = dma.done [#allocation3], 128
    $region13: #{_lambda_.1} parent=1 // pred_fallthru
      _
    // Predicated region
    $region14: #{_lambda_.1} parent=1 // pred_check
      _
    $region15: #{_lambda_.1} parent=1 // pred_check_branch
      %35 = sbr.rel (0) target = $region17
    $region16: #{_lambda_.1} parent=1 // pred_region
      %36 = dma.done [#allocation5], 1664
    $region17: #{_lambda_.1} parent=1 // pred_fallthru
      _
    %v37 = vld [vmem:[#allocation2] sm:$0xff]
    %v38 = vld [vmem:[#allocation4] sm:$0xff]
    %v39 = vld [vmem:[#allocation4 + $0x8] sm:$0xff]
    %v40 = vld [vmem:[#allocation4 + $0x10] sm:$0xff]
    %v41 = vld [vmem:[#allocation4 + $0x18] sm:$0xff]
    %v42 = vld [vmem:[#allocation4 + $0x20] sm:$0x1]
    %v43 = vld [vmem:[#allocation4 + $0x21] sm:$0xff]
    %v44 = vld [vmem:[#allocation4 + $0x29] sm:$0xff]
    %v45 = vld [vmem:[#allocation4 + $0x31] sm:$0xff]
    %v46 = vld [vmem:[#allocation4 + $0x39] sm:$0xff]
    %v47 = vld [vmem:[#allocation4 + $0x41] sm:$0xff]
    %v48 = vld [vmem:[#allocation4 + $0x49] sm:$0xff]
    %v49 = vld [vmem:[#allocation4 + $0x51] sm:$0xff]
    %v50 = vld [vmem:[#allocation4 + $0x59] sm:$0xff]
    %v51 = vld [vmem:[#allocation4 + $0x61] sm:$0x1]
    %v52 = vlaneseq
    %v53 = vshrl.u32 %v52, 7
    %v54 = vsub.s32 0, %v53
    %v55 = vrot.slane %v42, %v54
    %vm56 = vcmask 261120
    %v58 = vsel %vm56, %v37, 0
    %60 = vmatprep.subr.mxu0 0.0
    %61 = vmatpush1.msra.mxu0 0.0
    %62 = vmatprep.subr.mxu0 0.0
    %63 = vmatpush1.msra.mxu0 0.0
    %64 = vmatprep.subr.mxu0 0.0
    %65 = vmatpush1.msra.mxu0 0.0
    %66 = vmatprep.subr.mxu0 0.0
    %67 = vmatpush1.msra.mxu0 0.0
    %68 = vmatprep.subr.mxu0 0.0
    %69 = vmatpush1.msra.mxu0 0.0
    %70 = vmatprep.subr.mxu0 0.0
    %71 = vmatpush1.msra.mxu0 0.0
    %72 = vmatprep.subr.mxu0 0.0
    %73 = vmatpush1.msra.mxu0 0.0
    %74 = vmatprep.subr.mxu0 0.0
    %75 = vmatpush1.msra.mxu0 0.0
    %76 = vmatprep.subr.mxu0 0.0
    %77 = vmatpush1.msra.mxu0 0.0
    %78 = vmatprep.subr.mxu0 0.0
    %79 = vmatpush1.msra.mxu0 0.0
    %80 = vmatprep.subr.mxu0 0.0
    %81 = vmatpush1.msra.mxu0 0.0
    %82 = vmatprep.subr.mxu0 0.0
    %83 = vmatpush1.msra.mxu0 0.0
    %84 = vmatprep.subr.mxu0 0.0
    %85 = vmatpush1.msra.mxu0 %v41
    %86 = vmatprep.subr.mxu0 0.0
    %87 = vmatpush1.msra.mxu0 %v40
    %88 = vmatprep.subr.mxu0 0.0
    %89 = vmatpush1.msra.mxu0 %v39
    %90 = vmatprep.subr.mxu0 0.0
    %91 = vmatpush1.msra.mxu0 %v38
    %92 = vmatprep.subr.mxu0 0.0
    %93 = vmatpush2.msra.mxu0 0.0
    %94 = vmatprep.subr.mxu0 0.0
    %95 = vmatpush2.msra.mxu0 0.0
    %96 = vmatprep.subr.mxu0 0.0
    %97 = vmatpush2.msra.mxu0 0.0
    %98 = vmatprep.subr.mxu0 0.0
    %99 = vmatpush2.msra.mxu0 0.0
    %100 = vmatprep.subr.mxu0 0.0
    %101 = vmatpush2.msra.mxu0 0.0
    %102 = vmatprep.subr.mxu0 0.0
    %103 = vmatpush2.msra.mxu0 0.0
    %104 = vmatprep.subr.mxu0 0.0
    %105 = vmatpush2.msra.mxu0 0.0
    %106 = vmatprep.subr.mxu0 0.0
    %107 = vmatpush2.msra.mxu0 0.0
    %108 = vmatprep.subr.mxu0 0.0
    %109 = vmatpush2.msra.mxu0 0.0
    %110 = vmatprep.subr.mxu0 0.0
    %111 = vmatpush2.msra.mxu0 0.0
    %112 = vmatprep.subr.mxu0 0.0
    %113 = vmatpush2.msra.mxu0 0.0
    %114 = vmatprep.subr.mxu0 0.0
    %115 = vmatpush2.msra.mxu0 0.0
    %116 = vmatprep.subr.mxu0 0.0
    %117 = vmatpush2.msra.mxu0 0.0
    %118 = vmatprep.subr.mxu0 0.0
    %119 = vmatpush2.msra.mxu0 0.0
    %120 = vmatprep.subr.mxu0 0.0
    %121 = vmatpush2.msra.mxu0 0.0
    %122 = vmatprep.subr.mxu0 0.0
    %123 = vmatpush2.msra.mxu0 0.0
    %124 = vmatprep.mubr.f32.mxu0 0.0
    %125 = vmatmul.mubr.f32.gmra.mxu0 %v58
    %v126 = vpop.f32.mrf.mxu0
    %v127 = vadd.f32 %v55, %v126
    %v128 = vpop.f32.mrf.mxu0
    %129 = vdwg.mxu0
    %v130 = vmax.f32 %v127, 0.0
    %v131 = vlaneseq
    %v132 = vshrl.u32 %v131, 7
    %v133 = vsub.s32 0, %v132
    %v134 = vrot.slane %v51, %v133
    %vm135 = vcmask 523264
    %v137 = vsel %vm135, %v130, 0
    %139 = vmatprep.subr.mxu0 0.0
    %140 = vmatpush1.msra.mxu0 0.0
    %141 = vmatprep.subr.mxu0 0.0
    %142 = vmatpush1.msra.mxu0 0.0
    %143 = vmatprep.subr.mxu0 0.0
    %144 = vmatpush1.msra.mxu0 0.0
    %145 = vmatprep.subr.mxu0 0.0
    %146 = vmatpush1.msra.mxu0 0.0
    %147 = vmatprep.subr.mxu0 0.0
    %148 = vmatpush1.msra.mxu0 0.0
    %149 = vmatprep.subr.mxu0 0.0
    %150 = vmatpush1.msra.mxu0 0.0
    %151 = vmatprep.subr.mxu0 0.0
    %152 = vmatpush1.msra.mxu0 0.0
    %153 = vmatprep.subr.mxu0 0.0
    %154 = vmatpush1.msra.mxu0 0.0
    %155 = vmatprep.subr.mxu0 0.0
    %156 = vmatpush1.msra.mxu0 %v50
    %157 = vmatprep.subr.mxu0 0.0
    %158 = vmatpush1.msra.mxu0 %v49
    %159 = vmatprep.subr.mxu0 0.0
    %160 = vmatpush1.msra.mxu0 %v48
    %161 = vmatprep.subr.mxu0 0.0
    %162 = vmatpush1.msra.mxu0 %v47
    %163 = vmatprep.subr.mxu0 0.0
    %164 = vmatpush1.msra.mxu0 %v46
    %165 = vmatprep.subr.mxu0 0.0
    %166 = vmatpush1.msra.mxu0 %v45
    %167 = vmatprep.subr.mxu0 0.0
    %168 = vmatpush1.msra.mxu0 %v44
    %169 = vmatprep.subr.mxu0 0.0
    %170 = vmatpush1.msra.mxu0 %v43
    %171 = vmatprep.subr.mxu0 0.0
    %172 = vmatpush2.msra.mxu0 0.0
    %173 = vmatprep.subr.mxu0 0.0
    %174 = vmatpush2.msra.mxu0 0.0
    %175 = vmatprep.subr.mxu0 0.0
    %176 = vmatpush2.msra.mxu0 0.0
    %177 = vmatprep.subr.mxu0 0.0
    %178 = vmatpush2.msra.mxu0 0.0
    %179 = vmatprep.subr.mxu0 0.0
    %180 = vmatpush2.msra.mxu0 0.0
    %181 = vmatprep.subr.mxu0 0.0
    %182 = vmatpush2.msra.mxu0 0.0
    %183 = vmatprep.subr.mxu0 0.0
    %184 = vmatpush2.msra.mxu0 0.0
    %185 = vmatprep.subr.mxu0 0.0
    %186 = vmatpush2.msra.mxu0 0.0
    %187 = vmatprep.subr.mxu0 0.0
    %188 = vmatpush2.msra.mxu0 0.0
    %189 = vmatprep.subr.mxu0 0.0
    %190 = vmatpush2.msra.mxu0 0.0
    %191 = vmatprep.subr.mxu0 0.0
    %192 = vmatpush2.msra.mxu0 0.0
    %193 = vmatprep.subr.mxu0 0.0
    %194 = vmatpush2.msra.mxu0 0.0
    %195 = vmatprep.subr.mxu0 0.0
    %196 = vmatpush2.msra.mxu0 0.0
    %197 = vmatprep.subr.mxu0 0.0
    %198 = vmatpush2.msra.mxu0 0.0
    %199 = vmatprep.subr.mxu0 0.0
    %200 = vmatpush2.msra.mxu0 0.0
    %201 = vmatprep.subr.mxu0 0.0
    %202 = vmatpush2.msra.mxu0 0.0
    %203 = vmatprep.mubr.f32.mxu0 0.0
    %204 = vmatmul.mubr.f32.gmra.mxu0 %v137
    %v205 = vpop.f32.mrf.mxu0
    %v206 = vadd.f32 %v134, %v205
    %v207 = vpop.f32.mrf.mxu0
    %208 = vdwg.mxu0
    %v209 = vlaneseq
    %v210 = vand.u32 %v209, 127
    %vm211 = vcmp.eq.s32.totalorder %v210, 0
    %v212 = vsel %vm211, 1.0, 0.5
    %v213 = vmul.f32 %v206, %v212
    %v214 = vtanh.pop %v213
    %v215 = vmul.f32 %v214, 0.5
    %v216 = vadd.f32 %v215, 0.5
    %v217 = vsel %vm211, %v214, %v216
    %vm218 = vcmask 15360
    %219 = vst.msk [vmem:[%s2] sm:$0xff] %vm218, %v217
    // Predicated region
    $region18: #{_lambda_.1} parent=1 // pred_check
      _
    $region19: #{_lambda_.1} parent=1 // pred_check_branch
      %221 = sbr.rel (0) target = $region21
    $region20: #{_lambda_.1} parent=1 // pred_region
      _
    $region21: #{_lambda_.1} parent=1 // pred_fallthru
      _
    // Predicated region
    $region22: #{_lambda_.1} parent=1 // pred_check
      _
    $region23: #{_lambda_.1} parent=1 // pred_check_branch
      %223 = sbr.rel (0) target = $region25
    $region24: #{_lambda_.1} parent=1 // pred_region
      _
    $region25: #{_lambda_.1} parent=1 // pred_fallthru
      _
    %224 = vsyncpa [#allocation3], 1
    %225 = vsyncpa [#allocation5], 1

</llo_original>
